<compile_context>
chip_gen: v7x
topology: tpu7x:2x2x1
jax: 0.10.0
libtpu: 0.0.40
codegen_flags: <defaults>
</compile_context>

<pallas_src>
import functools

import numpy as np
import jax
import jax.numpy as jnp
from jax.experimental import pallas as pl
from jax.experimental.pallas import tpu as pltpu


# ---------------------------------------------------------------------------
# host-side constant builders
# ---------------------------------------------------------------------------
def _align_corners_matrix(out_size, in_size):
    """1-D bilinear interpolation matrix, align_corners=True semantics."""
    m = np.zeros((out_size, in_size), dtype=np.float32)
    if in_size == 1 or out_size == 1:
        m[:, 0] = 1.0
        return m
    scale = (in_size - 1) / (out_size - 1)
    for o in range(out_size):
        src = o * scale
        i0 = min(int(np.floor(src)), in_size - 1)
        i1 = min(i0 + 1, in_size - 1)
        f = src - i0
        m[o, i0] += 1.0 - f
        m[o, i1] += f
    return m


def _make_upsample_pad_matrix(H1, W1, H, W, Ho, Wo, py0, px0):
    """Dense (H1*W1, H*W) matrix doing bilinear x2 upsample AND zero padding
    into the skip-feature frame, so the kernel needs a single 2-D matmul."""
    A = np.zeros((H, H1), np.float32)
    A[py0:py0 + Ho, :] = _align_corners_matrix(Ho, H1)
    B = np.zeros((W, W1), np.float32)
    B[px0:px0 + Wo, :] = _align_corners_matrix(Wo, W1)
    K = np.kron(A, B)                       # (H*W, H1*W1)
    return np.ascontiguousarray(K.T)        # (H1*W1, H*W)


def _make_tap_masks(H, W, nb):
    """For each 3x3 tap (dy,dx): mask over the dense flat layout that zeroes
    positions whose (lane-rolled) source pixel would fall outside the image
    ('SAME' zero padding / cross-image wrap in the batch-blocked layout)."""
    HW = H * W
    j = np.arange(HW)
    r, c = j // W, j % W
    masks = np.zeros((9, HW), np.float32)
    for kh in range(3):
        for kw in range(3):
            dy, dx = kh - 1, kw - 1
            ok = (r + dy >= 0) & (r + dy < H) & (c + dx >= 0) & (c + dx < W)
            masks[kh * 3 + kw] = ok.astype(np.float32)
    return np.tile(masks, (1, nb))          # (9, nb*HW)


# ---------------------------------------------------------------------------
# fused kernel: nb batch elements per grid step, everything in registers
# ---------------------------------------------------------------------------
def _up_fused_kernel(ut_ref, w1_ref, b1_ref, w2_ref, b2_ref, mask_ref,
                     x1_ref, x2_ref, o_ref, *, W, HW, nb, compute_dtype):
    ut = ut_ref[...]                                 # (H1W1, HW)
    masks = mask_ref[...]                            # (9, nb*HW)

    # ---- 1) bilinear x2 upsample + spatial pad of x1: one matmul / image ----
    x1ups = [jnp.dot(x1_ref[i], ut, preferred_element_type=jnp.float32)
             for i in range(nb)]                     # each (C1, HW)
    x2s = [x2_ref[i] for i in range(nb)]             # each (C2, HW)

    # ---- 2) channel-concat([x2, x1_up]) + batch-concat along lanes ----
    x2_lane = x2s[0] if nb == 1 else jnp.concatenate(x2s, axis=1)
    x1_lane = x1ups[0] if nb == 1 else jnp.concatenate(x1ups, axis=1)
    act = jnp.concatenate([x2_lane, x1_lane], axis=0)   # (Cin, nb*HW)

    # ---- im2col as a register value: 9 lane-rolled, masked copies ----------
    # Masks zero every position whose rolled source pixel crosses an image
    # edge (so the roll's wrap-around, including across batch-block
    # boundaries, never leaks into the conv).
    def im2col(a):
        parts = []
        for kh in range(3):
            for kw in range(3):
                off = (kh - 1) * W + (kw - 1)
                if off == 0:
                    parts.append(a)
                else:
                    t = jnp.roll(a, -off, axis=1)
                    parts.append(t * masks[kh * 3 + kw:kh * 3 + kw + 1, :])
        return jnp.concatenate(parts, axis=0)        # (9*C, nb*HW)

    # ---- 3) conv3x3 #1 (BN folded) + ReLU ----------------------------------
    p1 = im2col(act).astype(compute_dtype)
    y1 = jnp.dot(w1_ref[...], p1, preferred_element_type=jnp.float32)
    y1 = jnp.maximum(y1 + b1_ref[...], 0.0)          # (Cmid, nb*HW)

    # ---- 4) conv3x3 #2 (BN folded) + ReLU ----------------------------------
    p2 = im2col(y1).astype(compute_dtype)
    y2 = jnp.dot(w2_ref[...], p2, preferred_element_type=jnp.float32)
    y2 = jnp.maximum(y2 + b2_ref[...], 0.0)          # (Cout, nb*HW)

    # ---- 5) lane-dense stores, one per image (HW-aligned column slices) ----
    for i in range(nb):
        o_ref[i] = y2[:, i * HW:(i + 1) * HW]


# ---------------------------------------------------------------------------
# wrapper: Up.forward (NCHW in, NCHW out), single pallas_call
# ---------------------------------------------------------------------------
def up_forward(x1_nchw, x2_nchw, params, eps=1e-5, batch_block=None,
               compute_dtype=jnp.float32):
    x1 = x1_nchw.astype(jnp.float32)
    x2 = x2_nchw.astype(jnp.float32)
    N, C1, H1, W1 = x1.shape
    N2, C2, H, W = x2.shape
    assert N == N2
    Ho, Wo = 2 * H1, 2 * W1
    assert H >= Ho and W >= Wo, "skip feature must be >= upsampled x1 spatially"
    py0, px0 = (H - Ho) // 2, (W - Wo) // 2

    w1, bn1 = params["w1"], params["bn1"]
    w2, bn2 = params["w2"], params["bn2"]
    Cmid, Cin = w1.shape[0], w1.shape[1]
    Cout = w2.shape[0]
    assert Cin == C1 + C2 and w2.shape[1] == Cmid

    # batch blocking: amortize per-grid-step overhead (v5e/v6e: 1 TensorCore)
    # while keeping >= 2 parallel steps when N >= 2 (v7x: 2 TensorCores).
    if batch_block is None:
        batch_block = max(1, min(4, N // 2))
    if N % batch_block != 0:
        batch_block = 1
    nb = batch_block
    HW, HW1 = H * W, H1 * W1

    # upsample+pad interpolation matrix and the 9 tap-validity masks.
    ut = jnp.asarray(_make_upsample_pad_matrix(H1, W1, H, W, Ho, Wo, py0, px0))
    masks = jnp.asarray(_make_tap_masks(H, W, nb))

    # fold inference BatchNorm into conv weights / bias; reorder weights to the
    # tap-major, channel-minor im2col row order used in the kernel.
    def fold(w, bn):
        gamma, beta, mean, var = bn
        s = gamma / jnp.sqrt(var + eps)
        co, ci = w.shape[0], w.shape[1]
        wm = (jnp.transpose(w, (0, 2, 3, 1)).reshape(co, 9 * ci)
              * s[:, None]).astype(compute_dtype)
        bv = (beta - mean * s).reshape(co, 1).astype(jnp.float32)
        return wm, bv

    w1m, b1v = fold(w1, bn1)
    w2m, b2v = fold(w2, bn2)

    # flat (lane-dense) inputs; reshapes are free row-major collapses.
    x1f = x1.reshape(N, C1, HW1)
    x2f = x2.reshape(N, C2, HW)

    kernel = functools.partial(_up_fused_kernel, W=W, HW=HW, nb=nb,
                               compute_dtype=compute_dtype)

    out_flat = pl.pallas_call(
        kernel,
        out_shape=jax.ShapeDtypeStruct((N, Cout, HW), jnp.float32),
        grid=(N // nb,),
        in_specs=[
            pl.BlockSpec((HW1, HW), lambda b: (0, 0)),            # upsample+pad matrix
            pl.BlockSpec((Cmid, 9 * Cin), lambda b: (0, 0)),      # conv1 weights (BN folded)
            pl.BlockSpec((Cmid, 1), lambda b: (0, 0)),            # conv1 bias
            pl.BlockSpec((Cout, 9 * Cmid), lambda b: (0, 0)),     # conv2 weights (BN folded)
            pl.BlockSpec((Cout, 1), lambda b: (0, 0)),            # conv2 bias
            pl.BlockSpec((9, nb * HW), lambda b: (0, 0)),         # tap validity masks
            pl.BlockSpec((nb, C1, HW1), lambda b: (b, 0, 0)),     # x1 flat
            pl.BlockSpec((nb, C2, HW), lambda b: (b, 0, 0)),      # x2 flat
        ],
        out_specs=pl.BlockSpec((nb, Cout, HW), lambda b: (b, 0, 0)),
        compiler_params=pltpu.CompilerParams(
            dimension_semantics=("parallel",)),
    )(ut, w1m, b1v, w2m, b2v, masks, x1f, x2f)

    # free metadata reshape back to NCHW.
    return out_flat.reshape(N, Cout, H, W)


# ---------------------------------------------------------------------------
# deterministic parameter init (shapes from Up(in=8, out=4, bilinear=True))
# ---------------------------------------------------------------------------
def init_params(key, in_channels, out_channels):
    mid_channels = in_channels // 2
    k = jax.random.split(key, 10)
    w1 = jax.random.normal(k[0], (mid_channels, in_channels, 3, 3), jnp.float32) * 0.1
    w2 = jax.random.normal(k[1], (out_channels, mid_channels, 3, 3), jnp.float32) * 0.1
    bn1 = (jax.random.uniform(k[2], (mid_channels,), minval=0.5, maxval=1.5),
           jax.random.normal(k[3], (mid_channels,)) * 0.1,
           jax.random.normal(k[4], (mid_channels,)) * 0.1,
           jax.random.uniform(k[5], (mid_channels,), minval=0.5, maxval=1.5))
    bn2 = (jax.random.uniform(k[6], (out_channels,), minval=0.5, maxval=1.5),
           jax.random.normal(k[7], (out_channels,)) * 0.1,
           jax.random.normal(k[8], (out_channels,)) * 0.1,
           jax.random.uniform(k[9], (out_channels,), minval=0.5, maxval=1.5))
    return {"w1": w1, "bn1": bn1, "w2": w2, "bn2": bn2}


# ---------------------------------------------------------------------------
# pure-JAX reference (correctness check)
# ---------------------------------------------------------------------------
def up_forward_ref(x1_nchw, x2_nchw, params):
    x1 = jnp.transpose(x1_nchw, (0, 2, 3, 1)).astype(jnp.float32)
    x2 = jnp.transpose(x2_nchw, (0, 2, 3, 1)).astype(jnp.float32)
    N, H, W, C = x1.shape
    mh = jnp.asarray(_align_corners_matrix(2 * H, H))
    mw = jnp.asarray(_align_corners_matrix(2 * W, W))
    x1 = jnp.einsum("oh,nhwc->nowc", mh, x1)
    x1 = jnp.einsum("pw,nowc->nopc", mw, x1)
    diffY = x2.shape[1] - x1.shape[1]
    diffX = x2.shape[2] - x1.shape[2]
    x1 = jnp.pad(x1, ((0, 0),
                      (diffY // 2, diffY - diffY // 2),
                      (diffX // 2, diffX - diffX // 2),
                      (0, 0)))
    x = jnp.concatenate([x2, x1], axis=-1)

    def cbr(x, w, bn):
        gamma, beta, mean, var = bn
        y = jax.lax.conv_general_dilated(
            x, jnp.transpose(w, (2, 3, 1, 0)), (1, 1), "SAME",
            dimension_numbers=("NHWC", "HWIO", "NHWC"))
        s = gamma / jnp.sqrt(var + 1e-5)
        return jnp.maximum(y * s + (beta - mean * s), 0.0)

    y = cbr(x, params["w1"], params["bn1"])
    y = cbr(y, params["w2"], params["bn2"])
    return jnp.transpose(y, (0, 3, 1, 2))


# ---------------------------------------------------------------------------
if __name__ == "__main__":
    key = jax.random.PRNGKey(0)
    k_x1, k_x2, k_p = jax.random.split(key, 3)

    # Up(in_channels=8, out_channels=4, bilinear=True)
    # x1: decoder feature (N, 4, 8, 8), x2: skip feature (N, 4, 16, 16)  [NCHW]
    N, C_half = 2, 4
    x1 = jax.random.normal(k_x1, (N, C_half, 8, 8), jnp.float32)
    x2 = jax.random.normal(k_x2, (N, C_half, 16, 16), jnp.float32)
    params = init_params(k_p, in_channels=2 * C_half, out_channels=4)

    out = jax.block_until_ready(up_forward(x1, x2, params))
    ref = jax.block_until_ready(up_forward_ref(x1, x2, params))
    assert out.shape == (N, 4, 16, 16), out.shape
    np.testing.assert_allclose(np.asarray(out), np.asarray(ref),
                               rtol=1e-4, atol=1e-4)

    # exercise the multi-image-per-grid-step (batch-blocked) path: N=4 -> nb=2
    x1b = jax.random.normal(jax.random.PRNGKey(1), (4, C_half, 8, 8), jnp.float32)
    x2b = jax.random.normal(jax.random.PRNGKey(2), (4, C_half, 16, 16), jnp.float32)
    outb = jax.block_until_ready(up_forward(x1b, x2b, params))
    refb = jax.block_until_ready(up_forward_ref(x1b, x2b, params))
    np.testing.assert_allclose(np.asarray(outb), np.asarray(refb),
                               rtol=1e-4, atol=1e-4)

    # bf16 matmul-operand option (v6e/v7x); loose tolerance smoke check only.
    outh = jax.block_until_ready(
        up_forward(x1, x2, params, compute_dtype=jnp.bfloat16))
    np.testing.assert_allclose(np.asarray(outh), np.asarray(ref),
                               rtol=1e-1, atol=3e-1)

    print("KERNEL_OK")
</pallas_src>

<mosaic_0001>
module attributes {stable_mosaic.version = 11 : i64} {
  func.func @_up_fused_kernel(%arg0: i32, %arg1: memref<64x256xf32, #tpu.memory_space<vmem>>, %arg2: memref<4x72xf32, #tpu.memory_space<vmem>>, %arg3: memref<4x1xf32, #tpu.memory_space<vmem>>, %arg4: memref<4x36xf32, #tpu.memory_space<vmem>>, %arg5: memref<4x1xf32, #tpu.memory_space<vmem>>, %arg6: memref<9x256xf32, #tpu.memory_space<vmem>>, %arg7: memref<1x4x64xf32, #tpu.memory_space<vmem>>, %arg8: memref<1x4x256xf32, #tpu.memory_space<vmem>>, %arg9: memref<1x4x256xf32, #tpu.memory_space<vmem>>) attributes {dimension_semantics = [#tpu.dimension_semantics<parallel>], iteration_bounds = array<i64: 2>, scalar_prefetch = 0 : i64, scratch_operands = 0 : i64, tpu.core_type = #tpu.core_type<tc>, window_params = [{pipeline_mode = #tpu.pipeline_mode<synchronous>, transform_indices = @transform_0, window_bounds = array<i64: 64, 256>}, {pipeline_mode = #tpu.pipeline_mode<synchronous>, transform_indices = @transform_1, window_bounds = array<i64: 4, 72>}, {pipeline_mode = #tpu.pipeline_mode<synchronous>, transform_indices = @transform_2, window_bounds = array<i64: 4, 1>}, {pipeline_mode = #tpu.pipeline_mode<synchronous>, transform_indices = @transform_3, window_bounds = array<i64: 4, 36>}, {pipeline_mode = #tpu.pipeline_mode<synchronous>, transform_indices = @transform_4, window_bounds = array<i64: 4, 1>}, {pipeline_mode = #tpu.pipeline_mode<synchronous>, transform_indices = @transform_5, window_bounds = array<i64: 9, 256>}, {transform_indices = @transform_6, window_bounds = array<i64: 1, 4, 64>}, {transform_indices = @transform_7, window_bounds = array<i64: 1, 4, 256>}, {transform_indices = @transform_8, window_bounds = array<i64: 1, 4, 256>}]} {
    %c0 = arith.constant 0 : index
    %c0_0 = arith.constant 0 : index
    %0 = vector.load %arg1[%c0, %c0_0] : memref<64x256xf32, #tpu.memory_space<vmem>>, vector<64x256xf32>
    %c0_1 = arith.constant 0 : index
    %c0_2 = arith.constant 0 : index
    %1 = vector.load %arg6[%c0_1, %c0_2] : memref<9x256xf32, #tpu.memory_space<vmem>>, vector<9x256xf32>
    %c0_3 = arith.constant 0 : index
    %c0_4 = arith.constant 0 : index
    %c0_5 = arith.constant 0 : index
    %2 = vector.load %arg7[%c0_3, %c0_4, %c0_5] : memref<1x4x64xf32, #tpu.memory_space<vmem>>, vector<1x4x64xf32>
    %3 = vector.shape_cast %2 : vector<1x4x64xf32> to vector<4x64xf32>
    %cst = arith.constant dense<0.000000e+00> : vector<4x256xf32>
    %4 = tpu.matmul %3, %0, %cst {dimension_numbers = #tpu.dot_dimension_numbers<[1], [0], [0], [1], [0, 0, 1, 1], [], []>} : vector<4x64xf32>, vector<64x256xf32>, vector<4x256xf32> -> vector<4x256xf32>
    %c0_6 = arith.constant 0 : index
    %c0_7 = arith.constant 0 : index
    %c0_8 = arith.constant 0 : index
    %5 = vector.load %arg8[%c0_6, %c0_7, %c0_8] : memref<1x4x256xf32, #tpu.memory_space<vmem>>, vector<1x4x256xf32>
    %6 = vector.shape_cast %5 : vector<1x4x256xf32> to vector<4x256xf32>
    %7 = tpu.concatenate %6, %4 in 0 : vector<4x256xf32>, vector<4x256xf32> -> vector<8x256xf32>
    %8 = vector.extract_strided_slice %7 {offsets = [0, 239], sizes = [8, 17], strides = [1, 1]} : vector<8x256xf32> to vector<8x17xf32>
    %9 = vector.extract_strided_slice %7 {offsets = [0, 0], sizes = [8, 239], strides = [1, 1]} : vector<8x256xf32> to vector<8x239xf32>
    %10 = tpu.concatenate %8, %9 in 1 : vector<8x17xf32>, vector<8x239xf32> -> vector<8x256xf32>
    %11 = vector.extract_strided_slice %1 {offsets = [0, 0], sizes = [1, 256], strides = [1, 1]} : vector<9x256xf32> to vector<1x256xf32>
    %12 = vector.broadcast %11 : vector<1x256xf32> to vector<8x256xf32>
    %13 = arith.mulf %10, %12 : vector<8x256xf32>
    %14 = vector.extract_strided_slice %7 {offsets = [0, 240], sizes = [8, 16], strides = [1, 1]} : vector<8x256xf32> to vector<8x16xf32>
    %15 = vector.extract_strided_slice %7 {offsets = [0, 0], sizes = [8, 240], strides = [1, 1]} : vector<8x256xf32> to vector<8x240xf32>
    %16 = tpu.concatenate %14, %15 in 1 : vector<8x16xf32>, vector<8x240xf32> -> vector<8x256xf32>
    %17 = vector.extract_strided_slice %1 {offsets = [1, 0], sizes = [1, 256], strides = [1, 1]} : vector<9x256xf32> to vector<1x256xf32>
    %18 = vector.broadcast %17 : vector<1x256xf32> to vector<8x256xf32>
    %19 = arith.mulf %16, %18 : vector<8x256xf32>
    %20 = vector.extract_strided_slice %7 {offsets = [0, 241], sizes = [8, 15], strides = [1, 1]} : vector<8x256xf32> to vector<8x15xf32>
    %21 = vector.extract_strided_slice %7 {offsets = [0, 0], sizes = [8, 241], strides = [1, 1]} : vector<8x256xf32> to vector<8x241xf32>
    %22 = tpu.concatenate %20, %21 in 1 : vector<8x15xf32>, vector<8x241xf32> -> vector<8x256xf32>
    %23 = vector.extract_strided_slice %1 {offsets = [2, 0], sizes = [1, 256], strides = [1, 1]} : vector<9x256xf32> to vector<1x256xf32>
    %24 = vector.broadcast %23 : vector<1x256xf32> to vector<8x256xf32>
    %25 = arith.mulf %22, %24 : vector<8x256xf32>
    %26 = vector.extract_strided_slice %7 {offsets = [0, 255], sizes = [8, 1], strides = [1, 1]} : vector<8x256xf32> to vector<8x1xf32>
    %27 = vector.extract_strided_slice %7 {offsets = [0, 0], sizes = [8, 255], strides = [1, 1]} : vector<8x256xf32> to vector<8x255xf32>
    %28 = tpu.concatenate %26, %27 in 1 : vector<8x1xf32>, vector<8x255xf32> -> vector<8x256xf32>
    %29 = vector.extract_strided_slice %1 {offsets = [3, 0], sizes = [1, 256], strides = [1, 1]} : vector<9x256xf32> to vector<1x256xf32>
    %30 = vector.broadcast %29 : vector<1x256xf32> to vector<8x256xf32>
    %31 = arith.mulf %28, %30 : vector<8x256xf32>
    %32 = vector.extract_strided_slice %7 {offsets = [0, 1], sizes = [8, 255], strides = [1, 1]} : vector<8x256xf32> to vector<8x255xf32>
    %33 = vector.extract_strided_slice %7 {offsets = [0, 0], sizes = [8, 1], strides = [1, 1]} : vector<8x256xf32> to vector<8x1xf32>
    %34 = tpu.concatenate %32, %33 in 1 : vector<8x255xf32>, vector<8x1xf32> -> vector<8x256xf32>
    %35 = vector.extract_strided_slice %1 {offsets = [5, 0], sizes = [1, 256], strides = [1, 1]} : vector<9x256xf32> to vector<1x256xf32>
    %36 = vector.broadcast %35 : vector<1x256xf32> to vector<8x256xf32>
    %37 = arith.mulf %34, %36 : vector<8x256xf32>
    %38 = vector.extract_strided_slice %7 {offsets = [0, 15], sizes = [8, 241], strides = [1, 1]} : vector<8x256xf32> to vector<8x241xf32>
    %39 = vector.extract_strided_slice %7 {offsets = [0, 0], sizes = [8, 15], strides = [1, 1]} : vector<8x256xf32> to vector<8x15xf32>
    %40 = tpu.concatenate %38, %39 in 1 : vector<8x241xf32>, vector<8x15xf32> -> vector<8x256xf32>
    %41 = vector.extract_strided_slice %1 {offsets = [6, 0], sizes = [1, 256], strides = [1, 1]} : vector<9x256xf32> to vector<1x256xf32>
    %42 = vector.broadcast %41 : vector<1x256xf32> to vector<8x256xf32>
    %43 = arith.mulf %40, %42 : vector<8x256xf32>
    %44 = vector.extract_strided_slice %7 {offsets = [0, 16], sizes = [8, 240], strides = [1, 1]} : vector<8x256xf32> to vector<8x240xf32>
    %45 = vector.extract_strided_slice %7 {offsets = [0, 0], sizes = [8, 16], strides = [1, 1]} : vector<8x256xf32> to vector<8x16xf32>
    %46 = tpu.concatenate %44, %45 in 1 : vector<8x240xf32>, vector<8x16xf32> -> vector<8x256xf32>
    %47 = vector.extract_strided_slice %1 {offsets = [7, 0], sizes = [1, 256], strides = [1, 1]} : vector<9x256xf32> to vector<1x256xf32>
    %48 = vector.broadcast %47 : vector<1x256xf32> to vector<8x256xf32>
    %49 = arith.mulf %46, %48 : vector<8x256xf32>
    %50 = vector.extract_strided_slice %7 {offsets = [0, 17], sizes = [8, 239], strides = [1, 1]} : vector<8x256xf32> to vector<8x239xf32>
    %51 = vector.extract_strided_slice %7 {offsets = [0, 0], sizes = [8, 17], strides = [1, 1]} : vector<8x256xf32> to vector<8x17xf32>
    %52 = tpu.concatenate %50, %51 in 1 : vector<8x239xf32>, vector<8x17xf32> -> vector<8x256xf32>
    %53 = vector.extract_strided_slice %1 {offsets = [8, 0], sizes = [1, 256], strides = [1, 1]} : vector<9x256xf32> to vector<1x256xf32>
    %54 = vector.broadcast %53 : vector<1x256xf32> to vector<8x256xf32>
    %55 = arith.mulf %52, %54 : vector<8x256xf32>
    %56 = tpu.concatenate %13, %19, %25, %31, %7, %37, %43, %49, %55 in 0 : vector<8x256xf32>, vector<8x256xf32>, vector<8x256xf32>, vector<8x256xf32>, vector<8x256xf32>, vector<8x256xf32>, vector<8x256xf32>, vector<8x256xf32>, vector<8x256xf32> -> vector<72x256xf32>
    %c0_9 = arith.constant 0 : index
    %c0_10 = arith.constant 0 : index
    %57 = vector.load %arg2[%c0_9, %c0_10] : memref<4x72xf32, #tpu.memory_space<vmem>>, vector<4x72xf32>
    %cst_11 = arith.constant dense<0.000000e+00> : vector<4x256xf32>
    %58 = tpu.matmul %57, %56, %cst_11 {dimension_numbers = #tpu.dot_dimension_numbers<[1], [0], [0], [1], [0, 0, 1, 1], [], []>} : vector<4x72xf32>, vector<72x256xf32>, vector<4x256xf32> -> vector<4x256xf32>
    %c0_12 = arith.constant 0 : index
    %c0_13 = arith.constant 0 : index
    %59 = vector.load %arg3[%c0_12, %c0_13] : memref<4x1xf32, #tpu.memory_space<vmem>>, vector<4x1xf32>
    %60 = vector.broadcast %59 : vector<4x1xf32> to vector<4x256xf32>
    %61 = arith.addf %58, %60 : vector<4x256xf32>
    %cst_14 = arith.constant 0.000000e+00 : f32
    %62 = vector.broadcast %cst_14 : f32 to vector<4x256xf32>
    %63 = arith.maximumf %61, %62 : vector<4x256xf32>
    %64 = vector.extract_strided_slice %63 {offsets = [0, 239], sizes = [4, 17], strides = [1, 1]} : vector<4x256xf32> to vector<4x17xf32>
    %65 = vector.extract_strided_slice %63 {offsets = [0, 0], sizes = [4, 239], strides = [1, 1]} : vector<4x256xf32> to vector<4x239xf32>
    %66 = tpu.concatenate %64, %65 in 1 : vector<4x17xf32>, vector<4x239xf32> -> vector<4x256xf32>
    %67 = vector.extract_strided_slice %1 {offsets = [0, 0], sizes = [1, 256], strides = [1, 1]} : vector<9x256xf32> to vector<1x256xf32>
    %68 = vector.broadcast %67 : vector<1x256xf32> to vector<4x256xf32>
    %69 = arith.mulf %66, %68 : vector<4x256xf32>
    %70 = vector.extract_strided_slice %63 {offsets = [0, 240], sizes = [4, 16], strides = [1, 1]} : vector<4x256xf32> to vector<4x16xf32>
    %71 = vector.extract_strided_slice %63 {offsets = [0, 0], sizes = [4, 240], strides = [1, 1]} : vector<4x256xf32> to vector<4x240xf32>
    %72 = tpu.concatenate %70, %71 in 1 : vector<4x16xf32>, vector<4x240xf32> -> vector<4x256xf32>
    %73 = vector.extract_strided_slice %1 {offsets = [1, 0], sizes = [1, 256], strides = [1, 1]} : vector<9x256xf32> to vector<1x256xf32>
    %74 = vector.broadcast %73 : vector<1x256xf32> to vector<4x256xf32>
    %75 = arith.mulf %72, %74 : vector<4x256xf32>
    %76 = vector.extract_strided_slice %63 {offsets = [0, 241], sizes = [4, 15], strides = [1, 1]} : vector<4x256xf32> to vector<4x15xf32>
    %77 = vector.extract_strided_slice %63 {offsets = [0, 0], sizes = [4, 241], strides = [1, 1]} : vector<4x256xf32> to vector<4x241xf32>
    %78 = tpu.concatenate %76, %77 in 1 : vector<4x15xf32>, vector<4x241xf32> -> vector<4x256xf32>
    %79 = vector.extract_strided_slice %1 {offsets = [2, 0], sizes = [1, 256], strides = [1, 1]} : vector<9x256xf32> to vector<1x256xf32>
    %80 = vector.broadcast %79 : vector<1x256xf32> to vector<4x256xf32>
    %81 = arith.mulf %78, %80 : vector<4x256xf32>
    %82 = vector.extract_strided_slice %63 {offsets = [0, 255], sizes = [4, 1], strides = [1, 1]} : vector<4x256xf32> to vector<4x1xf32>
    %83 = vector.extract_strided_slice %63 {offsets = [0, 0], sizes = [4, 255], strides = [1, 1]} : vector<4x256xf32> to vector<4x255xf32>
    %84 = tpu.concatenate %82, %83 in 1 : vector<4x1xf32>, vector<4x255xf32> -> vector<4x256xf32>
    %85 = vector.extract_strided_slice %1 {offsets = [3, 0], sizes = [1, 256], strides = [1, 1]} : vector<9x256xf32> to vector<1x256xf32>
    %86 = vector.broadcast %85 : vector<1x256xf32> to vector<4x256xf32>
    %87 = arith.mulf %84, %86 : vector<4x256xf32>
    %88 = vector.extract_strided_slice %63 {offsets = [0, 1], sizes = [4, 255], strides = [1, 1]} : vector<4x256xf32> to vector<4x255xf32>
    %89 = vector.extract_strided_slice %63 {offsets = [0, 0], sizes = [4, 1], strides = [1, 1]} : vector<4x256xf32> to vector<4x1xf32>
    %90 = tpu.concatenate %88, %89 in 1 : vector<4x255xf32>, vector<4x1xf32> -> vector<4x256xf32>
    %91 = vector.extract_strided_slice %1 {offsets = [5, 0], sizes = [1, 256], strides = [1, 1]} : vector<9x256xf32> to vector<1x256xf32>
    %92 = vector.broadcast %91 : vector<1x256xf32> to vector<4x256xf32>
    %93 = arith.mulf %90, %92 : vector<4x256xf32>
    %94 = vector.extract_strided_slice %63 {offsets = [0, 15], sizes = [4, 241], strides = [1, 1]} : vector<4x256xf32> to vector<4x241xf32>
    %95 = vector.extract_strided_slice %63 {offsets = [0, 0], sizes = [4, 15], strides = [1, 1]} : vector<4x256xf32> to vector<4x15xf32>
    %96 = tpu.concatenate %94, %95 in 1 : vector<4x241xf32>, vector<4x15xf32> -> vector<4x256xf32>
    %97 = vector.extract_strided_slice %1 {offsets = [6, 0], sizes = [1, 256], strides = [1, 1]} : vector<9x256xf32> to vector<1x256xf32>
    %98 = vector.broadcast %97 : vector<1x256xf32> to vector<4x256xf32>
    %99 = arith.mulf %96, %98 : vector<4x256xf32>
    %100 = vector.extract_strided_slice %63 {offsets = [0, 16], sizes = [4, 240], strides = [1, 1]} : vector<4x256xf32> to vector<4x240xf32>
    %101 = vector.extract_strided_slice %63 {offsets = [0, 0], sizes = [4, 16], strides = [1, 1]} : vector<4x256xf32> to vector<4x16xf32>
    %102 = tpu.concatenate %100, %101 in 1 : vector<4x240xf32>, vector<4x16xf32> -> vector<4x256xf32>
    %103 = vector.extract_strided_slice %1 {offsets = [7, 0], sizes = [1, 256], strides = [1, 1]} : vector<9x256xf32> to vector<1x256xf32>
    %104 = vector.broadcast %103 : vector<1x256xf32> to vector<4x256xf32>
    %105 = arith.mulf %102, %104 : vector<4x256xf32>
    %106 = vector.extract_strided_slice %63 {offsets = [0, 17], sizes = [4, 239], strides = [1, 1]} : vector<4x256xf32> to vector<4x239xf32>
    %107 = vector.extract_strided_slice %63 {offsets = [0, 0], sizes = [4, 17], strides = [1, 1]} : vector<4x256xf32> to vector<4x17xf32>
    %108 = tpu.concatenate %106, %107 in 1 : vector<4x239xf32>, vector<4x17xf32> -> vector<4x256xf32>
    %109 = vector.extract_strided_slice %1 {offsets = [8, 0], sizes = [1, 256], strides = [1, 1]} : vector<9x256xf32> to vector<1x256xf32>
    %110 = vector.broadcast %109 : vector<1x256xf32> to vector<4x256xf32>
    %111 = arith.mulf %108, %110 : vector<4x256xf32>
    %112 = tpu.concatenate %69, %75, %81, %87, %63, %93, %99, %105, %111 in 0 : vector<4x256xf32>, vector<4x256xf32>, vector<4x256xf32>, vector<4x256xf32>, vector<4x256xf32>, vector<4x256xf32>, vector<4x256xf32>, vector<4x256xf32>, vector<4x256xf32> -> vector<36x256xf32>
    %c0_15 = arith.constant 0 : index
    %c0_16 = arith.constant 0 : index
    %113 = vector.load %arg4[%c0_15, %c0_16] : memref<4x36xf32, #tpu.memory_space<vmem>>, vector<4x36xf32>
    %cst_17 = arith.constant dense<0.000000e+00> : vector<4x256xf32>
    %114 = tpu.matmul %113, %112, %cst_17 {dimension_numbers = #tpu.dot_dimension_numbers<[1], [0], [0], [1], [0, 0, 1, 1], [], []>} : vector<4x36xf32>, vector<36x256xf32>, vector<4x256xf32> -> vector<4x256xf32>
    %c0_18 = arith.constant 0 : index
    %c0_19 = arith.constant 0 : index
    %115 = vector.load %arg5[%c0_18, %c0_19] : memref<4x1xf32, #tpu.memory_space<vmem>>, vector<4x1xf32>
    %116 = vector.broadcast %115 : vector<4x1xf32> to vector<4x256xf32>
    %117 = arith.addf %114, %116 : vector<4x256xf32>
    %cst_20 = arith.constant 0.000000e+00 : f32
    %118 = vector.broadcast %cst_20 : f32 to vector<4x256xf32>
    %119 = arith.maximumf %117, %118 : vector<4x256xf32>
    %c0_21 = arith.constant 0 : index
    %c0_22 = arith.constant 0 : index
    %c0_23 = arith.constant 0 : index
    %120 = vector.load %arg9[%c0_21, %c0_22, %c0_23] : memref<1x4x256xf32, #tpu.memory_space<vmem>>, vector<1x4x256xf32>
    %121 = vector.shape_cast %120 : vector<1x4x256xf32> to vector<4x256xf32>
    %122 = vector.shape_cast %119 : vector<4x256xf32> to vector<1x4x256xf32>
    tpu.vector_store %arg9[%c0_21, %c0_22, %c0_23], %122 {strides = array<i32>} : memref<1x4x256xf32, #tpu.memory_space<vmem>>, vector<1x4x256xf32>,
    return
  }
  func.func @transform_0(%arg0: i32) -> (i32, i32) {
    %c0_i32 = arith.constant 0 : i32
    %c0_i32_0 = arith.constant 0 : i32
    %c0_i32_1 = arith.constant 0 : i32
    return %c0_i32, %c0_i32_0 : i32, i32
  }
  func.func @transform_1(%arg0: i32) -> (i32, i32) {
    %c0_i32 = arith.constant 0 : i32
    %c0_i32_0 = arith.constant 0 : i32
    %c0_i32_1 = arith.constant 0 : i32
    return %c0_i32, %c0_i32_0 : i32, i32
  }
  func.func @transform_2(%arg0: i32) -> (i32, i32) {
    %c0_i32 = arith.constant 0 : i32
    %c0_i32_0 = arith.constant 0 : i32
    %c0_i32_1 = arith.constant 0 : i32
    return %c0_i32, %c0_i32_0 : i32, i32
  }
  func.func @transform_3(%arg0: i32) -> (i32, i32) {
    %c0_i32 = arith.constant 0 : i32
    %c0_i32_0 = arith.constant 0 : i32
    %c0_i32_1 = arith.constant 0 : i32
    return %c0_i32, %c0_i32_0 : i32, i32
  }
  func.func @transform_4(%arg0: i32) -> (i32, i32) {
    %c0_i32 = arith.constant 0 : i32
    %c0_i32_0 = arith.constant 0 : i32
    %c0_i32_1 = arith.constant 0 : i32
    return %c0_i32, %c0_i32_0 : i32, i32
  }
  func.func @transform_5(%arg0: i32) -> (i32, i32) {
    %c0_i32 = arith.constant 0 : i32
    %c0_i32_0 = arith.constant 0 : i32
    %c0_i32_1 = arith.constant 0 : i32
    return %c0_i32, %c0_i32_0 : i32, i32
  }
  func.func @transform_6(%arg0: i32) -> (i32, i32, i32) {
    %c0_i32 = arith.constant 0 : i32
    %c0_i32_0 = arith.constant 0 : i32
    %c0_i32_1 = arith.constant 0 : i32
    return %arg0, %c0_i32, %c0_i32_0 : i32, i32, i32
  }
  func.func @transform_7(%arg0: i32) -> (i32, i32, i32) {
    %c0_i32 = arith.constant 0 : i32
    %c0_i32_0 = arith.constant 0 : i32
    %c0_i32_1 = arith.constant 0 : i32
    return %arg0, %c0_i32, %c0_i32_0 : i32, i32, i32
  }
  func.func @transform_8(%arg0: i32) -> (i32, i32, i32) {
    %c0_i32 = arith.constant 0 : i32
    %c0_i32_0 = arith.constant 0 : i32
    %c0_i32_1 = arith.constant 0 : i32
    return %arg0, %c0_i32, %c0_i32_0 : i32, i32, i32
  }
}

</mosaic_0001>

<llo_original>
// kernel: tpu_custom_call.1
$region0: #{tpu_custom_call.1}
  #allocation0 [shape = 'u32[]', space=smem, size = 0x4, offset = 0x4, fixed_abs, tag = 'smem constant byte address 0x4 - core index']
  #allocation1 [shape = 'u32[144,128]{1,0:T(1,128)}', space=vmem, size = 0x12000, scoped, tag = 'internal scratch']
  %s0 = inlined_call_operand.hbm [shape: f32[64,256], index: 0, kind: input, shape index: {}]
  %s1 = inlined_call_operand.vmem [shape: f32[4,72], index: 1, kind: input, shape index: {}]
  %s2 = inlined_call_operand.vmem [shape: f32[4,1], index: 2, kind: input, shape index: {}]
  %s3 = inlined_call_operand.vmem [shape: f32[4,36], index: 3, kind: input, shape index: {}]
  %s4 = inlined_call_operand.vmem [shape: f32[4,1], index: 4, kind: input, shape index: {}]
  %s5 = inlined_call_operand.hbm [shape: f32[9,256], index: 5, kind: input, shape index: {}]
  %s6 = inlined_call_operand.vmem [shape: f32[2,4,64], index: 6, kind: input, shape index: {}]
  %s7 = inlined_call_operand.vmem [shape: f32[2,4,256], index: 7, kind: input, shape index: {}]
  %s8 = inlined_call_operand.hbm [shape: f32[2,4,256], index: 8, kind: output, shape index: {}]
  %s9 = sld [smem:[#allocation0]]
  $region73: #{tpu_custom_call.1} parent=0
    _
  %s11 = ssub.s32 1, %s9
  %s12 = scalar_select 0, %s11, %s9
  $region1: #{tpu_custom_call.1} parent=0
    #allocation2 [shape = 'u8[65536]{0}', space=vmem, size = 0x10000, scoped, tag = 'input window, operand 0, single buffered']
    #allocation3 [shape = 's32[2]{0}', space=sflag, size = 0x8, scoped, tag = 'scoped memory for tpu_custom_call.1']
    #allocation4 [shape = 's32[2]{0}', space=sflag, size = 0x8, scoped, tag = 'scoped memory for tpu_custom_call.1']
    #allocation5 [shape = 'u8[16384]{0}', space=vmem, size = 0x4000, scoped, tag = 'input window, operand 5, single buffered']
    #allocation6 [shape = 's32[1]{0}', space=sflag, size = 0x4, scoped, tag = 'scoped memory for tpu_custom_call.1']
    #allocation7 [shape = 'u8[8192]{0}', space=vmem, size = 0x2000, scoped, tag = 'output window, operand 0']
    %13 = vsyncpa [#allocation3], 0
    %14 = vsyncpa [#allocation6], 0
    %15 = vsyncpa [#allocation4], 0
    %s16 = scalar_lea.sflag [#allocation4], 1
    %17 = vsyncpa %s16, 0
    loop: start=0, step=1, limit=4
    $region2: #{tpu_custom_call.1} parent=1 // loop_pre_header
      _
    $region3: #{tpu_custom_call.1} parent=1 // loop_header
      %s19 = sphi 0, %s23
      %p20 = scmp.ge.s32.totalorder %s19, 4
      %s27 = sphi 0, %s27
      %s29 = sphi 0, %s27
      %s30 = sphi 0, %s29
      %s44 = sphi 0, %s30
      %s48 = sphi 0, %s48
      %s50 = sphi 0, %s48
      %s51 = sphi 0, %s50
      %s65 = sphi 0, %s51
      %s69 = sphi 0, %s69
      %s71 = sphi 0, %s69
      %s72 = sphi 0, %s71
      %s86 = sphi 0, %s72
      %s90 = sphi 0, %s90
      %s92 = sphi 0, %s90
      %s93 = sphi 0, %s92
      %s107 = sphi 0, %s93
      %s111 = sphi 0, %s111
      %s113 = sphi 0, %s111
      %s114 = sphi 0, %s113
      %s128 = sphi 0, %s114
      %s132 = sphi 0, %s132
      %s134 = sphi 0, %s132
      %s135 = sphi 0, %s134
      %s149 = sphi 0, %s135
      %s155 = sphi 0, %s157
      %s158 = sphi 0, %s155
      %s159 = sphi 0, %s158
      %s175 = sphi 0, %s159
      %s181 = sphi 0, %s183
      %s184 = sphi 0, %s181
      %s185 = sphi 0, %s184
      %s201 = sphi 0, %s185
      %s207 = sphi 0, %s209
      %s210 = sphi 0, %s207
      %s211 = sphi 0, %s210
      %s227 = sphi 0, %s211
    $region4: #{tpu_custom_call.1} parent=1 // loop_header_branch
      %22 = sbr.rel (%p20) target = $region8
    $region5: #{tpu_custom_call.1} parent=1 // loop_body
      %s24 = ssub.s32 %s19, 1
      %s25 = ssub.s32 %s19, 2
      %s26 = sadd.s32 %s19, 1
      %s28 = sadd.s32 %s27, 1
      %p31 = scmp.eq.s32.totalorder %s19, 1
      %p32 = scmp.ne.s32.totalorder %s27, %s29
      %p33 = scmp.eq.s32.totalorder %s19, 0
      %p34 = por %p32, %p33
      %p35 = scmp.ne.s32.totalorder %s27, %s29
      %p36 = scmp.eq.s32.totalorder %s24, 1
      %p37 = por %p35, %p36
      %p38 = scmp.ne.s32.totalorder %s29, %s30
      %p39 = scmp.eq.s32.totalorder %s24, 0
      %p40 = por %p38, %p39
      %p41 = scmp.ne.s32.totalorder %s29, %s30
      %p42 = scmp.eq.s32.totalorder %s25, 1
      %p43 = por %p41, %p42
      %p45 = scmp.ne.s32.totalorder %s30, %s44
      %p46 = scmp.eq.s32.totalorder %s25, 0
      %p47 = por %p45, %p46
      %s49 = sadd.s32 %s48, 1
      %p52 = scmp.eq.s32.totalorder %s19, 1
      %p53 = scmp.ne.s32.totalorder %s48, %s50
      %p54 = scmp.eq.s32.totalorder %s19, 0
      %p55 = por %p53, %p54
      %p56 = scmp.ne.s32.totalorder %s48, %s50
      %p57 = scmp.eq.s32.totalorder %s24, 1
      %p58 = por %p56, %p57
      %p59 = scmp.ne.s32.totalorder %s50, %s51
      %p60 = scmp.eq.s32.totalorder %s24, 0
      %p61 = por %p59, %p60
      %p62 = scmp.ne.s32.totalorder %s50, %s51
      %p63 = scmp.eq.s32.totalorder %s25, 1
      %p64 = por %p62, %p63
      %p66 = scmp.ne.s32.totalorder %s51, %s65
      %p67 = scmp.eq.s32.totalorder %s25, 0
      %p68 = por %p66, %p67
      %s70 = sadd.s32 %s69, 1
      %p73 = scmp.eq.s32.totalorder %s19, 1
      %p74 = scmp.ne.s32.totalorder %s69, %s71
      %p75 = scmp.eq.s32.totalorder %s19, 0
      %p76 = por %p74, %p75
      %p77 = scmp.ne.s32.totalorder %s69, %s71
      %p78 = scmp.eq.s32.totalorder %s24, 1
      %p79 = por %p77, %p78
      %p80 = scmp.ne.s32.totalorder %s71, %s72
      %p81 = scmp.eq.s32.totalorder %s24, 0
      %p82 = por %p80, %p81
      %p83 = scmp.ne.s32.totalorder %s71, %s72
      %p84 = scmp.eq.s32.totalorder %s25, 1
      %p85 = por %p83, %p84
      %p87 = scmp.ne.s32.totalorder %s72, %s86
      %p88 = scmp.eq.s32.totalorder %s25, 0
      %p89 = por %p87, %p88
      %s91 = sadd.s32 %s90, 1
      %p94 = scmp.eq.s32.totalorder %s19, 1
      %p95 = scmp.ne.s32.totalorder %s90, %s92
      %p96 = scmp.eq.s32.totalorder %s19, 0
      %p97 = por %p95, %p96
      %p98 = scmp.ne.s32.totalorder %s90, %s92
      %p99 = scmp.eq.s32.totalorder %s24, 1
      %p100 = por %p98, %p99
      %p101 = scmp.ne.s32.totalorder %s92, %s93
      %p102 = scmp.eq.s32.totalorder %s24, 0
      %p103 = por %p101, %p102
      %p104 = scmp.ne.s32.totalorder %s92, %s93
      %p105 = scmp.eq.s32.totalorder %s25, 1
      %p106 = por %p104, %p105
      %p108 = scmp.ne.s32.totalorder %s93, %s107
      %p109 = scmp.eq.s32.totalorder %s25, 0
      %p110 = por %p108, %p109
      %s112 = sadd.s32 %s111, 1
      %p115 = scmp.eq.s32.totalorder %s19, 1
      %p116 = scmp.ne.s32.totalorder %s111, %s113
      %p117 = scmp.eq.s32.totalorder %s19, 0
      %p118 = por %p116, %p117
      %p119 = scmp.ne.s32.totalorder %s111, %s113
      %p120 = scmp.eq.s32.totalorder %s24, 1
      %p121 = por %p119, %p120
      %p122 = scmp.ne.s32.totalorder %s113, %s114
      %p123 = scmp.eq.s32.totalorder %s24, 0
      %p124 = por %p122, %p123
      %p125 = scmp.ne.s32.totalorder %s113, %s114
      %p126 = scmp.eq.s32.totalorder %s25, 1
      %p127 = por %p125, %p126
      %p129 = scmp.ne.s32.totalorder %s114, %s128
      %p130 = scmp.eq.s32.totalorder %s25, 0
      %p131 = por %p129, %p130
      %s133 = sadd.s32 %s132, 1
      %p136 = scmp.eq.s32.totalorder %s19, 1
      %p137 = scmp.ne.s32.totalorder %s132, %s134
      %p138 = scmp.eq.s32.totalorder %s19, 0
      %p139 = por %p137, %p138
      %p140 = scmp.ne.s32.totalorder %s132, %s134
      %p141 = scmp.eq.s32.totalorder %s24, 1
      %p142 = por %p140, %p141
      %p143 = scmp.ne.s32.totalorder %s134, %s135
      %p144 = scmp.eq.s32.totalorder %s24, 0
      %p145 = por %p143, %p144
      %p146 = scmp.ne.s32.totalorder %s134, %s135
      %p147 = scmp.eq.s32.totalorder %s25, 1
      %p148 = por %p146, %p147
      %p150 = scmp.ne.s32.totalorder %s135, %s149
      %p151 = scmp.eq.s32.totalorder %s25, 0
      %p152 = por %p150, %p151
      %s153 = ssub.s32 %s19, %s26
      %p154 = scmp.eq.s32.totalorder %s153, 0
      %s156 = sadd.s32 %s155, 1
      %s157 = scalar_select %p154, %s155, %s156
      %p160 = pneg %p154
      %p161 = scmp.eq.s32.totalorder %s19, 1
      %p162 = por %p160, %p161
      %p163 = scmp.ne.s32.totalorder %s155, %s158
      %p164 = scmp.eq.s32.totalorder %s19, 0
      %p165 = por %p163, %p164
      %p166 = scmp.ne.s32.totalorder %s155, %s158
      %p167 = scmp.eq.s32.totalorder %s24, 1
      %p168 = por %p166, %p167
      %p169 = scmp.ne.s32.totalorder %s158, %s159
      %p170 = scmp.eq.s32.totalorder %s24, 0
      %p171 = por %p169, %p170
      %p172 = scmp.ne.s32.totalorder %s158, %s159
      %p173 = scmp.eq.s32.totalorder %s25, 1
      %p174 = por %p172, %p173
      %p176 = scmp.ne.s32.totalorder %s159, %s175
      %p177 = scmp.eq.s32.totalorder %s25, 0
      %p178 = por %p176, %p177
      %s179 = ssub.s32 %s19, %s26
      %p180 = scmp.eq.s32.totalorder %s179, 0
      %s182 = sadd.s32 %s181, 1
      %s183 = scalar_select %p180, %s181, %s182
      %p186 = pneg %p180
      %p187 = scmp.eq.s32.totalorder %s19, 1
      %p188 = por %p186, %p187
      %p189 = scmp.ne.s32.totalorder %s181, %s184
      %p190 = scmp.eq.s32.totalorder %s19, 0
      %p191 = por %p189, %p190
      %p192 = scmp.ne.s32.totalorder %s181, %s184
      %p193 = scmp.eq.s32.totalorder %s24, 1
      %p194 = por %p192, %p193
      %p195 = scmp.ne.s32.totalorder %s184, %s185
      %p196 = scmp.eq.s32.totalorder %s24, 0
      %p197 = por %p195, %p196
      %p198 = scmp.ne.s32.totalorder %s184, %s185
      %p199 = scmp.eq.s32.totalorder %s25, 1
      %p200 = por %p198, %p199
      %p202 = scmp.ne.s32.totalorder %s185, %s201
      %p203 = scmp.eq.s32.totalorder %s25, 0
      %p204 = por %p202, %p203
      %s205 = ssub.s32 %s19, %s26
      %p206 = scmp.eq.s32.totalorder %s205, 0
      %s208 = sadd.s32 %s207, 1
      %s209 = scalar_select %p206, %s207, %s208
      %p212 = pneg %p206
      %p213 = scmp.eq.s32.totalorder %s19, 1
      %p214 = por %p212, %p213
      %p215 = scmp.ne.s32.totalorder %s207, %s210
      %p216 = scmp.eq.s32.totalorder %s19, 0
      %p217 = por %p215, %p216
      %p218 = scmp.ne.s32.totalorder %s207, %s210
      %p219 = scmp.eq.s32.totalorder %s24, 1
      %p220 = por %p218, %p219
      %p221 = scmp.ne.s32.totalorder %s210, %s211
      %p222 = scmp.eq.s32.totalorder %s24, 0
      %p223 = por %p221, %p222
      %p224 = scmp.ne.s32.totalorder %s210, %s211
      %p225 = scmp.eq.s32.totalorder %s25, 1
      %p226 = por %p224, %p225
      %p228 = scmp.ne.s32.totalorder %s211, %s227
      %p229 = scmp.eq.s32.totalorder %s25, 0
      %p230 = por %p228, %p229
      %p231 = scmp.le.s32.totalorder 1, %s19
      %p232 = scmp.lt.s32.totalorder %s19, 3
      %p233 = pnand %p231, %p232
      %p234 = pneg %p233
      // Predicated region
      $region9: #{tpu_custom_call.1} parent=5 // pred_check
        _
      $region10: #{tpu_custom_call.1} parent=5 // pred_check_branch
        %236 = sbr.rel (%p233) target = $region12
      $region11: #{tpu_custom_call.1} parent=5 // pred_region
        %s237 = ssub.s32 %s19, 1
        // Predicated region
        $region13: #{tpu_custom_call.1} parent=11 // pred_check
          %p238 = pneg %p40
        $region14: #{tpu_custom_call.1} parent=11 // pred_check_branch
          %240 = sbr.rel (%p238) target = $region16
        $region15: #{tpu_custom_call.1} parent=11 // pred_region
          %s242 = ssub.s32 2048, 2048
          %243 = vsyncadd [#allocation3], %s242
          %s244 = sshll.u32 [#allocation2], 4
          %s245 = int_to_ptr.vmem [resolvable:$true] %s244
          %250 = dma.hbm_to_vmem [thread:$0]  %s0, 2048, %s245, [#allocation3], 256, 256, 16
        $region16: #{tpu_custom_call.1} parent=11 // pred_fallthru
          _
        // Predicated region
        $region17: #{tpu_custom_call.1} parent=11 // pred_check
          %p251 = pneg %p61
        $region18: #{tpu_custom_call.1} parent=11 // pred_check_branch
          %253 = sbr.rel (%p251) target = $region20
        $region19: #{tpu_custom_call.1} parent=11 // pred_region
          _
        $region20: #{tpu_custom_call.1} parent=11 // pred_fallthru
          _
        // Predicated region
        $region21: #{tpu_custom_call.1} parent=11 // pred_check
          %p254 = pneg %p82
        $region22: #{tpu_custom_call.1} parent=11 // pred_check_branch
          %256 = sbr.rel (%p254) target = $region24
        $region23: #{tpu_custom_call.1} parent=11 // pred_region
          _
        $region24: #{tpu_custom_call.1} parent=11 // pred_fallthru
          _
        // Predicated region
        $region25: #{tpu_custom_call.1} parent=11 // pred_check
          %p257 = pneg %p103
        $region26: #{tpu_custom_call.1} parent=11 // pred_check_branch
          %259 = sbr.rel (%p257) target = $region28
        $region27: #{tpu_custom_call.1} parent=11 // pred_region
          _
        $region28: #{tpu_custom_call.1} parent=11 // pred_fallthru
          _
        // Predicated region
        $region29: #{tpu_custom_call.1} parent=11 // pred_check
          %p260 = pneg %p124
        $region30: #{tpu_custom_call.1} parent=11 // pred_check_branch
          %262 = sbr.rel (%p260) target = $region32
        $region31: #{tpu_custom_call.1} parent=11 // pred_region
          _
        $region32: #{tpu_custom_call.1} parent=11 // pred_fallthru
          _
        // Predicated region
        $region33: #{tpu_custom_call.1} parent=11 // pred_check
          %p263 = pneg %p145
        $region34: #{tpu_custom_call.1} parent=11 // pred_check_branch
          %265 = sbr.rel (%p263) target = $region36
        $region35: #{tpu_custom_call.1} parent=11 // pred_region
          %s267 = ssub.s32 512, 512
          %268 = vsyncadd [#allocation6], %s267
          %s269 = sshll.u32 [#allocation5], 4
          %s270 = int_to_ptr.vmem [resolvable:$true] %s269
          %275 = dma.hbm_to_vmem [thread:$0]  %s5, 512, %s270, [#allocation6], 256, 256, 16
        $region36: #{tpu_custom_call.1} parent=11 // pred_fallthru
          _
      $region12: #{tpu_custom_call.1} parent=5 // pred_fallthru
        _
      %p276 = scmp.lt.s32.totalorder %s19, 2
      // Predicated region
      $region37: #{tpu_custom_call.1} parent=5 // pred_check
        %p277 = pneg %p276
      $region38: #{tpu_custom_call.1} parent=5 // pred_check_branch
        %279 = sbr.rel (%p277) target = $region40
      $region39: #{tpu_custom_call.1} parent=5 // pred_region
        // Predicated region
        $region41: #{tpu_custom_call.1} parent=39 // pred_check
          %p280 = pneg %p165
        $region42: #{tpu_custom_call.1} parent=39 // pred_check_branch
          %282 = sbr.rel (%p280) target = $region44
        $region43: #{tpu_custom_call.1} parent=39 // pred_region
          %p283 = scmp.lt.s32.totalorder %s19, 1
          %s284 = scalar_select %p283, %s19, 1
          %s285 = smul.addr %s284, 4
          %s286 = scalar_lea.vmem %s6, %s285
        $region44: #{tpu_custom_call.1} parent=39 // pred_fallthru
          _
        // Predicated region
        $region45: #{tpu_custom_call.1} parent=39 // pred_check
          %p287 = pneg %p191
        $region46: #{tpu_custom_call.1} parent=39 // pred_check_branch
          %289 = sbr.rel (%p287) target = $region48
        $region47: #{tpu_custom_call.1} parent=39 // pred_region
          %p290 = scmp.lt.s32.totalorder %s19, 1
          %s291 = scalar_select %p290, %s19, 1
          %s292 = smul.addr %s291, 2
          %s293 = smul.addr %s292, 4
          %s294 = scalar_lea.vmem %s7, %s293
        $region48: #{tpu_custom_call.1} parent=39 // pred_fallthru
          _
      $region40: #{tpu_custom_call.1} parent=5 // pred_fallthru
        _
      %p295 = scmp.le.s32.totalorder 1, %s19
      %p296 = scmp.lt.s32.totalorder %s19, 3
      %p297 = pnand %p295, %p296
      %p298 = pneg %p297
      // Predicated region
      $region49: #{tpu_custom_call.1} parent=5 // pred_check
        _
      $region50: #{tpu_custom_call.1} parent=5 // pred_check_branch
        %300 = sbr.rel (%p297) target = $region52
      $region51: #{tpu_custom_call.1} parent=5 // pred_region
        %s301 = ssub.s32 %s19, 1
        // Predicated region
        $region53: #{tpu_custom_call.1} parent=51 // pred_check
          %p302 = pneg %p40
        $region54: #{tpu_custom_call.1} parent=51 // pred_check_branch
          %304 = sbr.rel (%p302) target = $region56
        $region55: #{tpu_custom_call.1} parent=51 // pred_region
          %305 = dma.done [#allocation3], 2048
        $region56: #{tpu_custom_call.1} parent=51 // pred_fallthru
          _
        // Predicated region
        $region57: #{tpu_custom_call.1} parent=51 // pred_check
          %p306 = pneg %p145
        $region58: #{tpu_custom_call.1} parent=51 // pred_check_branch
          %308 = sbr.rel (%p306) target = $region60
        $region59: #{tpu_custom_call.1} parent=51 // pred_region
          %309 = dma.done [#allocation6], 512
        $region60: #{tpu_custom_call.1} parent=51 // pred_fallthru
          _
        %p310 = pneg %p40
        %p311 = pneg %p37
        %p312 = pneg %p61
        %p313 = pneg %p58
        %p314 = pneg %p82
        %p315 = pneg %p79
        %p316 = pneg %p103
        %p317 = pneg %p100
        %p318 = pneg %p124
        %p319 = pneg %p121
        %p320 = pneg %p145
        %p321 = pneg %p142
        %p322 = scmp.lt.s32.totalorder %s24, 1
        %s323 = scalar_select %p322, %s24, 1
        %s324 = smul.addr %s323, 4
        %s325 = scalar_lea.vmem %s6, %s324
        %p326 = pneg %p171
        %p327 = pneg %p168
        %p328 = scmp.lt.s32.totalorder %s24, 1
        %s329 = scalar_select %p328, %s24, 1
        %s330 = smul.addr %s329, 2
        %s331 = smul.addr %s330, 4
        %s332 = scalar_lea.vmem %s7, %s331
        %p333 = pneg %p197
        %p334 = pneg %p194
        %p335 = pneg %p223
        %p336 = pneg %p220
        %s337 = sand.u32 %s210, 1
        %s338 = scalar_lea.sflag [#allocation4], %s337
        %s339 = sand.u32 %s210, 1
        %s340 = smul.addr %s339, 8
        %s341 = scalar_lea.vmem [#allocation7], %s340
        %p342 = scmp.lt.s32.totalorder %s24, 1
        %s343 = scalar_select %p342, %s24, 1
        %s344 = smul.addr %s343, 4
        %s345 = scalar_lea.vmem %s6, %s344
        %p346 = scmp.lt.s32.totalorder %s24, 1
        %s347 = scalar_select %p346, %s24, 1
        %s348 = smul.addr %s347, 2
        %s349 = smul.addr %s348, 4
        %s350 = scalar_lea.vmem %s7, %s349
        %v351 = vld [vmem:[#allocation2] sm:$0xff]
        %v352 = vld [vmem:[#allocation2 + $0x8] sm:$0xff]
        %v353 = vld [vmem:[#allocation2 + $0x10] sm:$0xff]
        %v354 = vld [vmem:[#allocation2 + $0x18] sm:$0xff]
        %v355 = vld [vmem:[#allocation2 + $0x20] sm:$0xff]
        %v356 = vld [vmem:[#allocation2 + $0x28] sm:$0xff]
        %v357 = vld [vmem:[#allocation2 + $0x30] sm:$0xff]
        %v358 = vld [vmem:[#allocation2 + $0x38] sm:$0xff]
        %v359 = vld [vmem:[#allocation2 + $0x40] sm:$0xff]
        %v360 = vld [vmem:[#allocation2 + $0x48] sm:$0xff]
        %v361 = vld [vmem:[#allocation2 + $0x50] sm:$0xff]
        %v362 = vld [vmem:[#allocation2 + $0x58] sm:$0xff]
        %v363 = vld [vmem:[#allocation2 + $0x60] sm:$0xff]
        %v364 = vld [vmem:[#allocation2 + $0x68] sm:$0xff]
        %v365 = vld [vmem:[#allocation2 + $0x70] sm:$0xff]
        %v366 = vld [vmem:[#allocation2 + $0x78] sm:$0xff]
        %v367 = vld [vmem:[#allocation5] sm:$0xff]
        %v368 = vld [vmem:[#allocation5 + $0x8] sm:$0xff]
        %v369 = vld [vmem:[#allocation5 + $0x10] sm:$0x1]
        %v370 = vld [vmem:[#allocation5 + $0x18] sm:$0x1]
        %v371 = vld [vmem:[%s345] sm:$0xf]
        %vm372 = vcmask 523264
        %v374 = vsel %vm372, %v371, 0
        %376 = vmatprep.subr.mxu0 %v352
        %377 = vmatpush1.msra.mxu0 %v351
        %378 = vmatprep.subr.mxu0 %v354
        %379 = vmatpush1.msra.mxu0 %v353
        %380 = vmatprep.subr.mxu0 %v356
        %381 = vmatpush1.msra.mxu0 %v355
        %382 = vmatprep.subr.mxu0 %v358
        %383 = vmatpush1.msra.mxu0 %v357
        %384 = vmatprep.subr.mxu0 %v360
        %385 = vmatpush1.msra.mxu0 %v359
        %386 = vmatprep.subr.mxu0 %v362
        %387 = vmatpush1.msra.mxu0 %v361
        %388 = vmatprep.subr.mxu0 %v364
        %389 = vmatpush1.msra.mxu0 %v363
        %390 = vmatprep.subr.mxu0 %v366
        %391 = vmatpush1.msra.mxu0 %v365
        %392 = vmatprep.subr.mxu0 0.0
        %393 = vmatpush1.msra.mxu0 0.0
        %394 = vmatprep.subr.mxu0 0.0
        %395 = vmatpush1.msra.mxu0 0.0
        %396 = vmatprep.subr.mxu0 0.0
        %397 = vmatpush1.msra.mxu0 0.0
        %398 = vmatprep.subr.mxu0 0.0
        %399 = vmatpush1.msra.mxu0 0.0
        %400 = vmatprep.subr.mxu0 0.0
        %401 = vmatpush1.msra.mxu0 0.0
        %402 = vmatprep.subr.mxu0 0.0
        %403 = vmatpush1.msra.mxu0 0.0
        %404 = vmatprep.subr.mxu0 0.0
        %405 = vmatpush1.msra.mxu0 0.0
        %406 = vmatprep.subr.mxu0 0.0
        %407 = vmatpush1.msra.mxu0 0.0
        %408 = vmatprep.subr.mxu0 0.0
        %409 = vmatpush1.msra.mxu0 0.0
        %410 = vmatprep.subr.mxu0 0.0
        %411 = vmatpush1.msra.mxu0 0.0
        %412 = vmatprep.subr.mxu0 0.0
        %413 = vmatpush1.msra.mxu0 0.0
        %414 = vmatprep.subr.mxu0 0.0
        %415 = vmatpush1.msra.mxu0 0.0
        %416 = vmatprep.subr.mxu0 0.0
        %417 = vmatpush1.msra.mxu0 0.0
        %418 = vmatprep.subr.mxu0 0.0
        %419 = vmatpush1.msra.mxu0 0.0
        %420 = vmatprep.subr.mxu0 0.0
        %421 = vmatpush1.msra.mxu0 0.0
        %422 = vmatprep.subr.mxu0 0.0
        %423 = vmatpush1.msra.mxu0 0.0
        %424 = vmatprep.subr.mxu0 0.0
        %425 = vmatpush1.msra.mxu0 0.0
        %426 = vmatprep.subr.mxu0 0.0
        %427 = vmatpush1.msra.mxu0 0.0
        %428 = vmatprep.subr.mxu0 0.0
        %429 = vmatpush1.msra.mxu0 0.0
        %430 = vmatprep.subr.mxu0 0.0
        %431 = vmatpush1.msra.mxu0 0.0
        %432 = vmatprep.subr.mxu0 0.0
        %433 = vmatpush1.msra.mxu0 0.0
        %434 = vmatprep.subr.mxu0 0.0
        %435 = vmatpush1.msra.mxu0 0.0
        %436 = vmatprep.subr.mxu0 0.0
        %437 = vmatpush1.msra.mxu0 0.0
        %438 = vmatprep.subr.mxu0 0.0
        %439 = vmatpush1.msra.mxu0 0.0
        %440 = vmatprep.mubr.f32.mxu0 0.0
        %441 = vmatmul.mubr.f32.gmra.mrb[0].mxu0 %v374
        %v442 = vpop.f32.mrb[0].mxu0
        %v443 = vadd.f32 0.0, %v442
        %v444 = vpop.f32.mrb[0].mxu0
        %v445 = vadd.f32 0.0, %v444
        %446 = vdwg.mxu0
        %v447 = vld [vmem:[%s350] sm:$0xff]
        %v449 = vcombine.high %v447, %v447
        %v453 = vrot.slane %v443, 4
        %v454 = vrot.slane %v445, 4
        %vm457 = vcmask 1043456
        %v458 = vsel %vm457, %v447, %v453
        %v459 = vsel %vm457, %v449, %v454
        %461 = vrot.lane.b32.xlu0 %v459, 17
        %v462 = vpop.permute.xlu0 %461
        %465 = vrot.lane.b32.xlu0 %v458, 17
        %v466 = vpop.permute.xlu0 %465
        %vm467 = vcmask 138240
        %v468 = vsel %vm467, %v466, %v462
        %v471 = vsel %vm467, %v462, %v466
        %v472 = vlaneseq
        %v473 = vshrl.u32 %v472, 7
        %v474 = vsub.s32 0, %v473
        %v475 = vrot.slane %v367, %v474
        %v476 = vlaneseq
        %v477 = vshrl.u32 %v476, 7
        %v478 = vsub.s32 0, %v477
        %v479 = vrot.slane %v368, %v478
        %v480 = vmul.f32 %v471, %v475
        %v481 = vmul.f32 %v468, %v479
        %482 = vrot.lane.b32.xlu0 %v459, 16
        %v483 = vpop.permute.xlu0 %482
        %485 = vrot.lane.b32.xlu0 %v458, 16
        %v486 = vpop.permute.xlu0 %485
        %vm487 = vcmask 130048
        %v488 = vsel %vm487, %v486, %v483
        %v491 = vsel %vm487, %v483, %v486
        %v492 = vlaneseq
        %v493 = vshrl.u32 %v492, 7
        %v494 = vsub.s32 1, %v493
        %v495 = vrot.slane %v367, %v494
        %v496 = vlaneseq
        %v497 = vshrl.u32 %v496, 7
        %v498 = vsub.s32 1, %v497
        %v499 = vrot.slane %v368, %v498
        %v500 = vmul.f32 %v491, %v495
        %v501 = vmul.f32 %v488, %v499
        %502 = vrot.lane.b32.xlu0 %v459, 15
        %v503 = vpop.permute.xlu0 %502
        %505 = vrot.lane.b32.xlu0 %v458, 15
        %v506 = vpop.permute.xlu0 %505
        %vm507 = vcmask 121856
        %v508 = vsel %vm507, %v506, %v503
        %v511 = vsel %vm507, %v503, %v506
        %v512 = vlaneseq
        %v513 = vshrl.u32 %v512, 7
        %v514 = vsub.s32 2, %v513
        %v515 = vrot.slane %v367, %v514
        %v516 = vlaneseq
        %v517 = vshrl.u32 %v516, 7
        %v518 = vsub.s32 2, %v517
        %v519 = vrot.slane %v368, %v518
        %v520 = vmul.f32 %v511, %v515
        %v521 = vmul.f32 %v508, %v519
        %522 = vrot.lane.b32.xlu0 %v459, 1
        %v523 = vpop.permute.xlu0 %522
        %525 = vrot.lane.b32.xlu0 %v458, 1
        %v526 = vpop.permute.xlu0 %525
        %vm527 = vcmask 7168
        %v528 = vsel %vm527, %v526, %v523
        %v531 = vsel %vm527, %v523, %v526
        %v532 = vlaneseq
        %v533 = vshrl.u32 %v532, 7
        %v534 = vsub.s32 3, %v533
        %v535 = vrot.slane %v367, %v534
        %v536 = vlaneseq
        %v537 = vshrl.u32 %v536, 7
        %v538 = vsub.s32 3, %v537
        %v539 = vrot.slane %v368, %v538
        %v540 = vmul.f32 %v531, %v535
        %v541 = vmul.f32 %v528, %v539
        %542 = vrot.lane.b32.xlu0 %v458, 127
        %v543 = vpop.permute.xlu0 %542
        %544 = vrot.lane.b32.xlu0 %v459, 127
        %v545 = vpop.permute.xlu0 %544
        %vm546 = vcmask 1039360
        %v547 = vsel %vm546, %v543, %v545
        %v551 = vsel %vm546, %v545, %v543
        %v552 = vlaneseq
        %v553 = vshrl.u32 %v552, 7
        %v554 = vsub.s32 5, %v553
        %v555 = vrot.slane %v367, %v554
        %v556 = vlaneseq
        %v557 = vshrl.u32 %v556, 7
        %v558 = vsub.s32 5, %v557
        %v559 = vrot.slane %v368, %v558
        %v560 = vmul.f32 %v547, %v555
        %v561 = vmul.f32 %v551, %v559
        %562 = vrot.lane.b32.xlu0 %v458, 113
        %v563 = vpop.permute.xlu0 %562
        %564 = vrot.lane.b32.xlu0 %v459, 113
        %v565 = vpop.permute.xlu0 %564
        %vm566 = vcmask 924672
        %v567 = vsel %vm566, %v563, %v565
        %v571 = vsel %vm566, %v565, %v563
        %v572 = vlaneseq
        %v573 = vshrl.u32 %v572, 7
        %v574 = vsub.s32 6, %v573
        %v575 = vrot.slane %v367, %v574
        %v576 = vlaneseq
        %v577 = vshrl.u32 %v576, 7
        %v578 = vsub.s32 6, %v577
        %v579 = vrot.slane %v368, %v578
        %v580 = vmul.f32 %v567, %v575
        %v581 = vmul.f32 %v571, %v579
        %582 = vrot.lane.b32.xlu0 %v458, 112
        %v583 = vpop.permute.xlu0 %582
        %584 = vrot.lane.b32.xlu0 %v459, 112
        %v585 = vpop.permute.xlu0 %584
        %vm586 = vcmask 916480
        %v587 = vsel %vm586, %v583, %v585
        %v591 = vsel %vm586, %v585, %v583
        %v592 = vlaneseq
        %v593 = vshrl.u32 %v592, 7
        %v594 = vsub.s32 7, %v593
        %v595 = vrot.slane %v367, %v594
        %v596 = vlaneseq
        %v597 = vshrl.u32 %v596, 7
        %v598 = vsub.s32 7, %v597
        %v599 = vrot.slane %v368, %v598
        %v600 = vmul.f32 %v587, %v595
        %v601 = vmul.f32 %v591, %v599
        %602 = vrot.lane.b32.xlu0 %v458, 111
        %v603 = vpop.permute.xlu0 %602
        %604 = vrot.lane.b32.xlu0 %v459, 111
        %v605 = vpop.permute.xlu0 %604
        %vm606 = vcmask 908288
        %v607 = vsel %vm606, %v603, %v605
        %v611 = vsel %vm606, %v605, %v603
        %v612 = vlaneseq
        %v613 = vshrl.u32 %v612, 7
        %v614 = vsub.s32 0, %v613
        %v615 = vrot.slane %v369, %v614
        %v616 = vlaneseq
        %v617 = vshrl.u32 %v616, 7
        %v618 = vsub.s32 0, %v617
        %v619 = vrot.slane %v370, %v618
        %v620 = vmul.f32 %v607, %v615
        %v621 = vmul.f32 %v611, %v619
        %v622 = vld [vmem:[%s1] sm:$0xf]
        %v623 = vld [vmem:[%s2] sm:$0xf]
        %625 = vset.pattern.permute.xlu0 0
        %626 = vperm.xlu0 %625, %v623
        %v627 = vpop.permute.xlu0 %626
        %vm629 = vcmask 588800
        %v631 = vsel %vm629, %v622, 0
        %633 = vmatprep.subr.mxu0 %v481
        %634 = vmatpush1.msra.mxu0 %v480
        %635 = vmatprep.subr.mxu0 %v501
        %636 = vmatpush1.msra.mxu0 %v500
        %637 = vmatprep.subr.mxu0 %v521
        %638 = vmatpush1.msra.mxu0 %v520
        %639 = vmatprep.subr.mxu0 %v541
        %640 = vmatpush1.msra.mxu0 %v540
        %641 = vmatprep.subr.mxu0 %v459
        %642 = vmatpush1.msra.mxu0 %v458
        %643 = vmatprep.subr.mxu0 %v561
        %644 = vmatpush1.msra.mxu0 %v560
        %645 = vmatprep.subr.mxu0 %v581
        %646 = vmatpush1.msra.mxu0 %v580
        %647 = vmatprep.subr.mxu0 %v601
        %648 = vmatpush1.msra.mxu0 %v600
        %649 = vmatprep.subr.mxu0 %v621
        %650 = vmatpush1.msra.mxu0 %v620
        %651 = vmatprep.subr.mxu0 0.0
        %652 = vmatpush1.msra.mxu0 0.0
        %653 = vmatprep.subr.mxu0 0.0
        %654 = vmatpush1.msra.mxu0 0.0
        %655 = vmatprep.subr.mxu0 0.0
        %656 = vmatpush1.msra.mxu0 0.0
        %657 = vmatprep.subr.mxu0 0.0
        %658 = vmatpush1.msra.mxu0 0.0
        %659 = vmatprep.subr.mxu0 0.0
        %660 = vmatpush1.msra.mxu0 0.0
        %661 = vmatprep.subr.mxu0 0.0
        %662 = vmatpush1.msra.mxu0 0.0
        %663 = vmatprep.subr.mxu0 0.0
        %664 = vmatpush1.msra.mxu0 0.0
        %665 = vmatprep.subr.mxu0 0.0
        %666 = vmatpush1.msra.mxu0 0.0
        %667 = vmatprep.subr.mxu0 0.0
        %668 = vmatpush1.msra.mxu0 0.0
        %669 = vmatprep.subr.mxu0 0.0
        %670 = vmatpush1.msra.mxu0 0.0
        %671 = vmatprep.subr.mxu0 0.0
        %672 = vmatpush1.msra.mxu0 0.0
        %673 = vmatprep.subr.mxu0 0.0
        %674 = vmatpush1.msra.mxu0 0.0
        %675 = vmatprep.subr.mxu0 0.0
        %676 = vmatpush1.msra.mxu0 0.0
        %677 = vmatprep.subr.mxu0 0.0
        %678 = vmatpush1.msra.mxu0 0.0
        %679 = vmatprep.subr.mxu0 0.0
        %680 = vmatpush1.msra.mxu0 0.0
        %681 = vmatprep.subr.mxu0 0.0
        %682 = vmatpush1.msra.mxu0 0.0
        %683 = vmatprep.subr.mxu0 0.0
        %684 = vmatpush1.msra.mxu0 0.0
        %685 = vmatprep.subr.mxu0 0.0
        %686 = vmatpush1.msra.mxu0 0.0
        %687 = vmatprep.subr.mxu0 0.0
        %688 = vmatpush1.msra.mxu0 0.0
        %689 = vmatprep.subr.mxu0 0.0
        %690 = vmatpush1.msra.mxu0 0.0
        %691 = vmatprep.subr.mxu0 0.0
        %692 = vmatpush1.msra.mxu0 0.0
        %693 = vmatprep.subr.mxu0 0.0
        %694 = vmatpush1.msra.mxu0 0.0
        %695 = vmatprep.subr.mxu0 0.0
        %696 = vmatpush1.msra.mxu0 0.0
        %697 = vmatprep.mubr.f32.mxu0 0.0
        %698 = vmatmul.mubr.f32.gmra.mrb[0].mxu0 %v631
        %v699 = vpop.f32.mrb[0].mxu0
        %v700 = vadd.f32 %v627, %v699
        %v701 = vpop.f32.mrb[0].mxu0
        %v702 = vadd.f32 %v627, %v701
        %703 = vdwg.mxu0
        %v704 = vmax.f32 %v700, 0.0
        %v705 = vmax.f32 %v702, 0.0
        %707 = vrot.lane.b32.xlu0 %v705, 17
        %v708 = vpop.permute.xlu0 %707
        %711 = vrot.lane.b32.xlu0 %v704, 17
        %v712 = vpop.permute.xlu0 %711
        %v713 = vsel %vm467, %v712, %v708
        %v716 = vsel %vm467, %v708, %v712
        %v717 = vmul.f32 %v716, %v475
        %v718 = vmul.f32 %v713, %v479
        %719 = vrot.lane.b32.xlu0 %v705, 16
        %v720 = vpop.permute.xlu0 %719
        %722 = vrot.lane.b32.xlu0 %v704, 16
        %v723 = vpop.permute.xlu0 %722
        %v724 = vsel %vm487, %v723, %v720
        %v727 = vsel %vm487, %v720, %v723
        %v728 = vmul.f32 %v727, %v495
        %v729 = vmul.f32 %v724, %v499
        %730 = vrot.lane.b32.xlu0 %v705, 15
        %v731 = vpop.permute.xlu0 %730
        %733 = vrot.lane.b32.xlu0 %v704, 15
        %v734 = vpop.permute.xlu0 %733
        %v735 = vsel %vm507, %v734, %v731
        %v738 = vsel %vm507, %v731, %v734
        %v739 = vmul.f32 %v738, %v515
        %v740 = vmul.f32 %v735, %v519
        %741 = vrot.lane.b32.xlu0 %v705, 1
        %v742 = vpop.permute.xlu0 %741
        %744 = vrot.lane.b32.xlu0 %v704, 1
        %v745 = vpop.permute.xlu0 %744
        %v746 = vsel %vm527, %v745, %v742
        %v749 = vsel %vm527, %v742, %v745
        %v750 = vmul.f32 %v749, %v535
        %v751 = vmul.f32 %v746, %v539
        %752 = vrot.lane.b32.xlu0 %v704, 127
        %v753 = vpop.permute.xlu0 %752
        %754 = vrot.lane.b32.xlu0 %v705, 127
        %v755 = vpop.permute.xlu0 %754
        %v756 = vsel %vm546, %v753, %v755
        %v760 = vsel %vm546, %v755, %v753
        %v761 = vmul.f32 %v756, %v555
        %v762 = vmul.f32 %v760, %v559
        %763 = vrot.lane.b32.xlu0 %v704, 113
        %v764 = vpop.permute.xlu0 %763
        %765 = vrot.lane.b32.xlu0 %v705, 113
        %v766 = vpop.permute.xlu0 %765
        %v767 = vsel %vm566, %v764, %v766
        %v771 = vsel %vm566, %v766, %v764
        %v772 = vmul.f32 %v767, %v575
        %v773 = vmul.f32 %v771, %v579
        %774 = vrot.lane.b32.xlu0 %v704, 112
        %v775 = vpop.permute.xlu0 %774
        %776 = vrot.lane.b32.xlu0 %v705, 112
        %v777 = vpop.permute.xlu0 %776
        %v778 = vsel %vm586, %v775, %v777
        %v782 = vsel %vm586, %v777, %v775
        %v783 = vmul.f32 %v778, %v595
        %v784 = vmul.f32 %v782, %v599
        %785 = vrot.lane.b32.xlu0 %v704, 111
        %v786 = vpop.permute.xlu0 %785
        %787 = vrot.lane.b32.xlu0 %v705, 111
        %v788 = vpop.permute.xlu0 %787
        %v789 = vsel %vm606, %v786, %v788
        %v793 = vsel %vm606, %v788, %v786
        %v794 = vmul.f32 %v789, %v615
        %v795 = vmul.f32 %v793, %v619
        %v798 = vrot.slane %v728, 4
        %v799 = vrot.slane %v729, 4
        %v804 = vrot.slane %v750, 4
        %v805 = vrot.slane %v751, 4
        %v810 = vrot.slane %v761, 4
        %v811 = vrot.slane %v762, 4
        %v816 = vrot.slane %v783, 4
        %v817 = vrot.slane %v784, 4
        %v820 = vsel %vm457, %v717, %v798
        %v821 = vsel %vm457, %v718, %v799
        %v822 = vsel %vm457, %v739, %v804
        %v823 = vsel %vm457, %v740, %v805
        %v824 = vsel %vm457, %v704, %v810
        %v825 = vsel %vm457, %v705, %v811
        %v826 = vsel %vm457, %v772, %v816
        %v827 = vsel %vm457, %v773, %v817
        %v828 = vld [vmem:[%s3] sm:$0xf]
        %v829 = vld [vmem:[%s4] sm:$0xf]
        %831 = vset.pattern.permute.xlu0 0
        %832 = vperm.xlu0 %831, %v829
        %v833 = vpop.permute.xlu0 %832
        %vm835 = vcmask 293888
        %v837 = vsel %vm835, %v828, 0
        %v840 = vsel %vm457, %v794, 0
        %v843 = vsel %vm457, %v795, 0
        %845 = vmatprep.subr.mxu0 %v821
        %846 = vmatpush1.msra.mxu0 %v820
        %847 = vmatprep.subr.mxu0 %v823
        %848 = vmatpush1.msra.mxu0 %v822
        %849 = vmatprep.subr.mxu0 %v825
        %850 = vmatpush1.msra.mxu0 %v824
        %851 = vmatprep.subr.mxu0 %v827
        %852 = vmatpush1.msra.mxu0 %v826
        %853 = vmatprep.subr.mxu0 %v843
        %854 = vmatpush1.msra.mxu0 %v840
        %855 = vmatprep.subr.mxu0 0.0
        %856 = vmatpush1.msra.mxu0 0.0
        %857 = vmatprep.subr.mxu0 0.0
        %858 = vmatpush1.msra.mxu0 0.0
        %859 = vmatprep.subr.mxu0 0.0
        %860 = vmatpush1.msra.mxu0 0.0
        %861 = vmatprep.subr.mxu0 0.0
        %862 = vmatpush1.msra.mxu0 0.0
        %863 = vmatprep.subr.mxu0 0.0
        %864 = vmatpush1.msra.mxu0 0.0
        %865 = vmatprep.subr.mxu0 0.0
        %866 = vmatpush1.msra.mxu0 0.0
        %867 = vmatprep.subr.mxu0 0.0
        %868 = vmatpush1.msra.mxu0 0.0
        %869 = vmatprep.subr.mxu0 0.0
        %870 = vmatpush1.msra.mxu0 0.0
        %871 = vmatprep.subr.mxu0 0.0
        %872 = vmatpush1.msra.mxu0 0.0
        %873 = vmatprep.subr.mxu0 0.0
        %874 = vmatpush1.msra.mxu0 0.0
        %875 = vmatprep.subr.mxu0 0.0
        %876 = vmatpush1.msra.mxu0 0.0
        %877 = vmatprep.subr.mxu0 0.0
        %878 = vmatpush1.msra.mxu0 0.0
        %879 = vmatprep.subr.mxu0 0.0
        %880 = vmatpush1.msra.mxu0 0.0
        %881 = vmatprep.subr.mxu0 0.0
        %882 = vmatpush1.msra.mxu0 0.0
        %883 = vmatprep.subr.mxu0 0.0
        %884 = vmatpush1.msra.mxu0 0.0
        %885 = vmatprep.subr.mxu0 0.0
        %886 = vmatpush1.msra.mxu0 0.0
        %887 = vmatprep.subr.mxu0 0.0
        %888 = vmatpush1.msra.mxu0 0.0
        %889 = vmatprep.subr.mxu0 0.0
        %890 = vmatpush1.msra.mxu0 0.0
        %891 = vmatprep.subr.mxu0 0.0
        %892 = vmatpush1.msra.mxu0 0.0
        %893 = vmatprep.subr.mxu0 0.0
        %894 = vmatpush1.msra.mxu0 0.0
        %895 = vmatprep.subr.mxu0 0.0
        %896 = vmatpush1.msra.mxu0 0.0
        %897 = vmatprep.subr.mxu0 0.0
        %898 = vmatpush1.msra.mxu0 0.0
        %899 = vmatprep.subr.mxu0 0.0
        %900 = vmatpush1.msra.mxu0 0.0
        %901 = vmatprep.subr.mxu0 0.0
        %902 = vmatpush1.msra.mxu0 0.0
        %903 = vmatprep.subr.mxu0 0.0
        %904 = vmatpush1.msra.mxu0 0.0
        %905 = vmatprep.subr.mxu0 0.0
        %906 = vmatpush1.msra.mxu0 0.0
        %907 = vmatprep.subr.mxu0 0.0
        %908 = vmatpush1.msra.mxu0 0.0
        %909 = vmatprep.mubr.f32.mxu0 0.0
        %910 = vmatmul.mubr.f32.gmra.mrb[0].mxu0 %v837
        %v911 = vpop.f32.mrb[0].mxu0
        %v912 = vadd.f32 %v833, %v911
        %v913 = vpop.f32.mrb[0].mxu0
        %v914 = vadd.f32 %v833, %v913
        %915 = vdwg.mxu0
        %v916 = vmax.f32 %v912, 0.0
        %v917 = vmax.f32 %v914, 0.0
        %v920 = vcombine.low %v916, %v917
        %922 = vst [vmem:[%s341] sm:$0xff] %v920
        %s923 = sand.u32 %s210, 1
        %s924 = scalar_lea.sflag [#allocation4], %s923
        %s925 = sand.u32 %s210, 1
        %s926 = smul.addr %s925, 8
        %s927 = scalar_lea.vmem [#allocation7], %s926
        // Predicated region
        $region61: #{tpu_custom_call.1} parent=51 // pred_check
          %p928 = pneg %p220
        $region62: #{tpu_custom_call.1} parent=51 // pred_check_branch
          %930 = sbr.rel (%p928) target = $region64
        $region63: #{tpu_custom_call.1} parent=51 // pred_region
          %s932 = ssub.s32 128, 128
          %933 = vsyncadd %s924, %s932
          %s934 = smul.addr %s24, 2
          %s935 = smul.addr %s934, 64
          %s936 = scalar_lea.hbm %s8, %s935
          %s938 = sshll.u32 %s927, 4
          %s939 = int_to_ptr.vmem [resolvable:$true] %s938
          %941 = dma.vmem_to_hbm [thread:$0]  %s939, 128, %s936, %s924
        $region64: #{tpu_custom_call.1} parent=51 // pred_fallthru
          _
      $region52: #{tpu_custom_call.1} parent=5 // pred_fallthru
        _
      %p942 = scmp.le.s32.totalorder 2, %s19
      // Predicated region
      $region65: #{tpu_custom_call.1} parent=5 // pred_check
        %p943 = pneg %p942
      $region66: #{tpu_custom_call.1} parent=5 // pred_check_branch
        %945 = sbr.rel (%p943) target = $region68
      $region67: #{tpu_custom_call.1} parent=5 // pred_region
        %s946 = ssub.s32 %s19, 2
        // Predicated region
        $region69: #{tpu_custom_call.1} parent=67 // pred_check
          %p947 = pneg %p226
        $region70: #{tpu_custom_call.1} parent=67 // pred_check_branch
          %949 = sbr.rel (%p947) target = $region72
        $region71: #{tpu_custom_call.1} parent=67 // pred_region
          %s950 = sand.u32 %s211, 1
          %s951 = scalar_lea.sflag [#allocation4], %s950
          %s952 = sand.u32 %s211, 1
          %s953 = smul.addr %s952, 8
          %s954 = scalar_lea.vmem [#allocation7], %s953
          %955 = dma.done %s951, 128
        $region72: #{tpu_custom_call.1} parent=67 // pred_fallthru
          _
      $region68: #{tpu_custom_call.1} parent=5 // pred_fallthru
        _
    $region6: #{tpu_custom_call.1} parent=1 // loop_footer
      %s23 = sadd.s32 1, %s19
    $region7: #{tpu_custom_call.1} parent=1 // loop_footer_branch
      %18 = sbr.rel target = $region3
    $region8: #{tpu_custom_call.1} parent=1 // loop_exit
      _
    %956 = vsyncpa [#allocation3], 1
    %s957 = scalar_lea.sflag [#allocation3], 1
    %958 = vsyncpa %s957, 1
    %959 = vsyncpa [#allocation6], 1
    %960 = vsyncpa [#allocation4], 1
    %s961 = scalar_lea.sflag [#allocation4], 1
    %962 = vsyncpa %s961, 1

</llo_original>
